<compile_context>
chip_gen: v6e
topology: v6e:2x2x1
jax: 0.10.0
libtpu: 0.0.40
codegen_flags: <defaults>
</compile_context>

<pallas_src>
import numpy as np
import jax
import jax.numpy as jnp
from jax.experimental import pallas as pl
from jax.experimental.pallas import tpu as pltpu


def _maxmin_kernel(xe_ref, xo_ref, o_ref):
    a = xe_ref[...]                        # (1, tm, Dh) even group members
    b = xo_ref[...]                        # (1, tm, Dh) odd  group members
    o_ref[:, 0, :, :] = jnp.maximum(a, b)  # "maxout" half
    o_ref[:, 1, :, :] = jnp.minimum(a, b)  # "minout" half


def _pick_row_tile(M, Dh, itemsize):
    """Row tile over the flattened middle dims: ~512 KiB per input block so
    2 inputs + 1 output, double-buffered, stay well below scoped VMEM on
    v5e/v6e (128 MiB) and v7x (64 MiB physical / 32 MiB default scoped)."""
    target_bytes = 512 * 1024
    tm = max(1, target_bytes // max(Dh * itemsize, 1))
    if tm >= M:
        return M                           # full extent: no (8,128) constraint
    return max(8, (tm // 8) * 8)           # partial tiles must be 8-divisible


@jax.jit
def maxmin_forward(x):
    """MaxMin.forward(x) for the module defaults (group_size=2, axis=-1)."""
    # TODO(synk): axis != -1 variants of maxout/minout_by_group not wired up
    # (the module's default axis=-1 is what the forward pass uses).
    if x.ndim < 2:
        raise ValueError("MaxMin forward needs rank >= 2 (torch.cat(dim=1)).")
    shape = x.shape
    D = shape[-1]
    if D % 2 != 0:
        raise ValueError(f"last dim ({D}) must be a multiple of group_size=2")
    Dh = D // 2
    N0 = shape[0]
    M = 1
    for s in shape[1:-1]:
        M *= s

    x3 = x.reshape(N0, M, D)
    # Layout plumbing outside the kernel: deinterleave the pair members so the
    # kernel sees two lane-dense operands (Dh mapped to lanes).
    # TODO(synk): fold this deinterleave into the kernel (lane gather / strided
    # load) to drop the extra XLA pass over the input.
    xe = x3[:, :, 0::2]
    xo = x3[:, :, 1::2]

    tm = _pick_row_tile(M, Dh, jnp.dtype(x.dtype).itemsize)
    grid = (N0, pl.cdiv(M, tm))

    in_spec = pl.BlockSpec((1, tm, Dh), lambda n, i: (n, i, 0))
    out_spec = pl.BlockSpec((1, 2, tm, Dh), lambda n, i: (n, 0, i, 0))

    out4 = pl.pallas_call(
        _maxmin_kernel,
        out_shape=jax.ShapeDtypeStruct((N0, 2, M, Dh), x.dtype),
        grid_spec=pl.GridSpec(grid=grid, in_specs=[in_spec, in_spec],
                              out_specs=out_spec),
        compiler_params=pltpu.CompilerParams(
            dimension_semantics=("parallel", "parallel")),
    )(xe, xo)

    # Free (row-major) reshape reproducing torch.cat((maxes, mins), dim=1).
    if x.ndim == 2:
        return out4.reshape(N0, D)
    return out4.reshape((N0, 2 * shape[1]) + tuple(shape[2:-1]) + (Dh,))


# ---------------- pure-JAX reference (mirrors the PyTorch math) ----------------
def _maxmin_reference(x):
    lead, D = x.shape[:-1], x.shape[-1]
    xg = x.reshape(lead + (D // 2, 2))
    maxes = jnp.max(xg, axis=-1)
    mins = jnp.min(xg, axis=-1)
    return jnp.concatenate([maxes, mins], axis=1)


if __name__ == "__main__":
    key = jax.random.PRNGKey(0)
    k1, k2 = jax.random.split(key)

    # 4-D NCHW-style input (groups over W, concat over channels).
    x4 = jax.random.normal(k1, (2, 4, 16, 16), dtype=jnp.float32)
    # 2-D (batch, features) input (the common GroupSort-style use case).
    x2 = jax.random.normal(k2, (8, 32), dtype=jnp.float32)

    out4 = jax.block_until_ready(maxmin_forward(x4))
    out2 = jax.block_until_ready(maxmin_forward(x2))

    assert out4.shape == (2, 8, 16, 8), out4.shape
    assert out2.shape == (8, 32), out2.shape

    np.testing.assert_array_equal(np.asarray(out4), np.asarray(_maxmin_reference(x4)))
    np.testing.assert_array_equal(np.asarray(out2), np.asarray(_maxmin_reference(x2)))

    print("KERNEL_OK")
</pallas_src>

<mosaic_0001>
module attributes {stable_mosaic.version = 11 : i64} {
  func.func @_maxmin_kernel(%arg0: i32, %arg1: i32, %arg2: memref<1x64x8xf32, #tpu.memory_space<vmem>>, %arg3: memref<1x64x8xf32, #tpu.memory_space<vmem>>, %arg4: memref<1x2x64x8xf32, #tpu.memory_space<vmem>>) attributes {dimension_semantics = [#tpu.dimension_semantics<parallel>, #tpu.dimension_semantics<parallel>], iteration_bounds = array<i64: 2, 1>, scalar_prefetch = 0 : i64, scratch_operands = 0 : i64, tpu.core_type = #tpu.core_type<tc>, window_params = [{transform_indices = @transform_0, window_bounds = array<i64: 1, 64, 8>}, {transform_indices = @transform_1, window_bounds = array<i64: 1, 64, 8>}, {transform_indices = @transform_2, window_bounds = array<i64: 1, 2, 64, 8>}]} {
    %c0 = arith.constant 0 : index
    %c0_0 = arith.constant 0 : index
    %c0_1 = arith.constant 0 : index
    %0 = vector.load %arg2[%c0, %c0_0, %c0_1] : memref<1x64x8xf32, #tpu.memory_space<vmem>>, vector<1x64x8xf32>
    %c0_2 = arith.constant 0 : index
    %c0_3 = arith.constant 0 : index
    %c0_4 = arith.constant 0 : index
    %1 = vector.load %arg3[%c0_2, %c0_3, %c0_4] : memref<1x64x8xf32, #tpu.memory_space<vmem>>, vector<1x64x8xf32>
    %2 = arith.maximumf %0, %1 : vector<1x64x8xf32>
    %c0_5 = arith.constant 0 : index
    %c0_6 = arith.constant 0 : index
    %c0_7 = arith.constant 0 : index
    %c0_8 = arith.constant 0 : index
    %3 = vector.load %arg4[%c0_5, %c0_6, %c0_7, %c0_8] : memref<1x2x64x8xf32, #tpu.memory_space<vmem>>, vector<1x1x64x8xf32>
    %4 = vector.shape_cast %3 : vector<1x1x64x8xf32> to vector<1x64x8xf32>
    %5 = vector.shape_cast %2 : vector<1x64x8xf32> to vector<1x1x64x8xf32>
    tpu.vector_store %arg4[%c0_5, %c0_6, %c0_7, %c0_8], %5 {strides = array<i32>} : memref<1x2x64x8xf32, #tpu.memory_space<vmem>>, vector<1x1x64x8xf32>,
    %6 = arith.minimumf %0, %1 : vector<1x64x8xf32>
    %c0_9 = arith.constant 0 : index
    %c1 = arith.constant 1 : index
    %c0_10 = arith.constant 0 : index
    %c0_11 = arith.constant 0 : index
    %7 = vector.load %arg4[%c0_9, %c1, %c0_10, %c0_11] : memref<1x2x64x8xf32, #tpu.memory_space<vmem>>, vector<1x1x64x8xf32>
    %8 = vector.shape_cast %7 : vector<1x1x64x8xf32> to vector<1x64x8xf32>
    %9 = vector.shape_cast %6 : vector<1x64x8xf32> to vector<1x1x64x8xf32>
    tpu.vector_store %arg4[%c0_9, %c1, %c0_10, %c0_11], %9 {strides = array<i32>} : memref<1x2x64x8xf32, #tpu.memory_space<vmem>>, vector<1x1x64x8xf32>,
    return
  }
  func.func @transform_0(%arg0: i32, %arg1: i32) -> (i32, i32, i32) {
    %c0_i32 = arith.constant 0 : i32
    %c0_i32_0 = arith.constant 0 : i32
    return %arg0, %arg1, %c0_i32 : i32, i32, i32
  }
  func.func @transform_1(%arg0: i32, %arg1: i32) -> (i32, i32, i32) {
    %c0_i32 = arith.constant 0 : i32
    %c0_i32_0 = arith.constant 0 : i32
    return %arg0, %arg1, %c0_i32 : i32, i32, i32
  }
  func.func @transform_2(%arg0: i32, %arg1: i32) -> (i32, i32, i32, i32) {
    %c0_i32 = arith.constant 0 : i32
    %c0_i32_0 = arith.constant 0 : i32
    %c0_i32_1 = arith.constant 0 : i32
    return %arg0, %c0_i32, %arg1, %c0_i32_0 : i32, i32, i32, i32
  }
}

</mosaic_0001>

<llo_original>
// kernel: maxmin_forward.1
$region0: #{maxmin_forward.1}
  #allocation0 [shape = 'u32[]', space=smem, size = 0x4, offset = 0x4, fixed_abs, tag = 'smem constant byte address 0x4 - core index']
  #allocation1 [shape = 'u32[144,128]{1,0:T(1,128)}', space=vmem, size = 0x12000, scoped, tag = 'internal scratch']
  %s0 = inlined_call_operand.vmem [shape: f32[2,64,8], index: 0, kind: input, shape index: {}]
  %s1 = inlined_call_operand.vmem [shape: f32[2,64,8], index: 1, kind: input, shape index: {}]
  %s2 = inlined_call_operand.vmem [shape: f32[2,2,64,8], index: 2, kind: output, shape index: {}]
  %s3 = sld [smem:[#allocation0]]
  $region41: #{maxmin_forward.1} parent=0
    _
  %s5 = ssub.s32 1, %s3
  %s6 = scalar_select 0, %s5, %s3
  loop: start=0, step=1, limit=4
  $region2: #{maxmin_forward.1} parent=0 // loop_pre_header
    _
  $region3: #{maxmin_forward.1} parent=0 // loop_header
    %s8 = sphi 0, %s12
    %p9 = scmp.ge.s32.totalorder %s8, 4
    %s15 = sphi 0, %s27
    %s16 = sphi 0, %s23
    %s17 = sphi 0, %s15
    %s18 = sphi 0, %s16
    %s19 = sphi 0, %s17
    %s20 = sphi 0, %s18
    %s32 = sphi 0, %s34
    %s35 = sphi 0, %s32
    %s36 = sphi 0, %s35
    %s52 = sphi 0, %s36
    %s60 = sphi 0, %s62
    %s63 = sphi 0, %s60
    %s64 = sphi 0, %s63
    %s80 = sphi 0, %s64
    %s88 = sphi 0, %s90
    %s91 = sphi 0, %s88
    %s92 = sphi 0, %s91
    %s108 = sphi 0, %s92
  $region4: #{maxmin_forward.1} parent=0 // loop_header_branch
    %11 = sbr.rel (%p9) target = $region8
  $region5: #{maxmin_forward.1} parent=0 // loop_body
    %s13 = ssub.s32 %s8, 1
    %s14 = ssub.s32 %s8, 2
    %s21 = sadd.s32 1, %s16
    %p22 = scmp.ge.s32.totalorder %s21, 1
    %s23 = scalar_select %p22, 0, %s21
    %s24 = sadd.s32 1, %s15
    %s25 = scalar_select %p22, %s24, %s15
    %p26 = scmp.ge.s32.totalorder %s25, 2
    %s27 = scalar_select %p26, 0, %s25
    %s28 = ssub.s32 %s15, %s27
    %s29 = ssub.s32 %s16, %s23
    %s30 = sor.u32 %s28, %s29
    %p31 = scmp.eq.s32.totalorder %s30, 0
    %s33 = sadd.s32 %s32, 1
    %s34 = scalar_select %p31, %s32, %s33
    %p37 = pneg %p31
    %p38 = scmp.eq.s32.totalorder %s8, 1
    %p39 = por %p37, %p38
    %p40 = scmp.ne.s32.totalorder %s32, %s35
    %p41 = scmp.eq.s32.totalorder %s8, 0
    %p42 = por %p40, %p41
    %p43 = scmp.ne.s32.totalorder %s32, %s35
    %p44 = scmp.eq.s32.totalorder %s13, 1
    %p45 = por %p43, %p44
    %p46 = scmp.ne.s32.totalorder %s35, %s36
    %p47 = scmp.eq.s32.totalorder %s13, 0
    %p48 = por %p46, %p47
    %p49 = scmp.ne.s32.totalorder %s35, %s36
    %p50 = scmp.eq.s32.totalorder %s14, 1
    %p51 = por %p49, %p50
    %p53 = scmp.ne.s32.totalorder %s36, %s52
    %p54 = scmp.eq.s32.totalorder %s14, 0
    %p55 = por %p53, %p54
    %s56 = ssub.s32 %s15, %s27
    %s57 = ssub.s32 %s16, %s23
    %s58 = sor.u32 %s56, %s57
    %p59 = scmp.eq.s32.totalorder %s58, 0
    %s61 = sadd.s32 %s60, 1
    %s62 = scalar_select %p59, %s60, %s61
    %p65 = pneg %p59
    %p66 = scmp.eq.s32.totalorder %s8, 1
    %p67 = por %p65, %p66
    %p68 = scmp.ne.s32.totalorder %s60, %s63
    %p69 = scmp.eq.s32.totalorder %s8, 0
    %p70 = por %p68, %p69
    %p71 = scmp.ne.s32.totalorder %s60, %s63
    %p72 = scmp.eq.s32.totalorder %s13, 1
    %p73 = por %p71, %p72
    %p74 = scmp.ne.s32.totalorder %s63, %s64
    %p75 = scmp.eq.s32.totalorder %s13, 0
    %p76 = por %p74, %p75
    %p77 = scmp.ne.s32.totalorder %s63, %s64
    %p78 = scmp.eq.s32.totalorder %s14, 1
    %p79 = por %p77, %p78
    %p81 = scmp.ne.s32.totalorder %s64, %s80
    %p82 = scmp.eq.s32.totalorder %s14, 0
    %p83 = por %p81, %p82
    %s84 = ssub.s32 %s15, %s27
    %s85 = ssub.s32 %s16, %s23
    %s86 = sor.u32 %s84, %s85
    %p87 = scmp.eq.s32.totalorder %s86, 0
    %s89 = sadd.s32 %s88, 1
    %s90 = scalar_select %p87, %s88, %s89
    %p93 = pneg %p87
    %p94 = scmp.eq.s32.totalorder %s8, 1
    %p95 = por %p93, %p94
    %p96 = scmp.ne.s32.totalorder %s88, %s91
    %p97 = scmp.eq.s32.totalorder %s8, 0
    %p98 = por %p96, %p97
    %p99 = scmp.ne.s32.totalorder %s88, %s91
    %p100 = scmp.eq.s32.totalorder %s13, 1
    %p101 = por %p99, %p100
    %p102 = scmp.ne.s32.totalorder %s91, %s92
    %p103 = scmp.eq.s32.totalorder %s13, 0
    %p104 = por %p102, %p103
    %p105 = scmp.ne.s32.totalorder %s91, %s92
    %p106 = scmp.eq.s32.totalorder %s14, 1
    %p107 = por %p105, %p106
    %p109 = scmp.ne.s32.totalorder %s92, %s108
    %p110 = scmp.eq.s32.totalorder %s14, 0
    %p111 = por %p109, %p110
    %p112 = scmp.le.s32.totalorder 1, %s8
    %p113 = scmp.lt.s32.totalorder %s8, 3
    %p114 = pnand %p112, %p113
    %p115 = pneg %p114
    // Predicated region
    $region9: #{maxmin_forward.1} parent=5 // pred_check
      _
    $region10: #{maxmin_forward.1} parent=5 // pred_check_branch
      %117 = sbr.rel (%p114) target = $region12
    $region11: #{maxmin_forward.1} parent=5 // pred_region
      %s118 = ssub.s32 %s8, 1
    $region12: #{maxmin_forward.1} parent=5 // pred_fallthru
      _
    %p119 = scmp.lt.s32.totalorder %s8, 2
    // Predicated region
    $region13: #{maxmin_forward.1} parent=5 // pred_check
      %p120 = pneg %p119
    $region14: #{maxmin_forward.1} parent=5 // pred_check_branch
      %122 = sbr.rel (%p120) target = $region16
    $region15: #{maxmin_forward.1} parent=5 // pred_region
      // Predicated region
      $region17: #{maxmin_forward.1} parent=15 // pred_check
        %p123 = pneg %p42
      $region18: #{maxmin_forward.1} parent=15 // pred_check_branch
        %125 = sbr.rel (%p123) target = $region20
      $region19: #{maxmin_forward.1} parent=15 // pred_region
        %s126 = smul.u32 8, %s16
        %p127 = scmp.lt.s32.totalorder %s15, 1
        %s128 = scalar_select %p127, %s15, 1
        %p129 = scmp.lt.s32.totalorder %s126, 7
        %s130 = scalar_select %p129, %s126, 7
        %s131 = smul.addr %s128, 8
        %s132 = sadd.s32 %s130, %s131
        %s133 = smul.addr %s132, 8
        %s134 = scalar_lea.vmem %s0, %s133
        %s135 = smul.u32 8, %s16
      $region20: #{maxmin_forward.1} parent=15 // pred_fallthru
        _
      // Predicated region
      $region21: #{maxmin_forward.1} parent=15 // pred_check
        %p136 = pneg %p70
      $region22: #{maxmin_forward.1} parent=15 // pred_check_branch
        %138 = sbr.rel (%p136) target = $region24
      $region23: #{maxmin_forward.1} parent=15 // pred_region
        %s139 = smul.u32 8, %s16
        %p140 = scmp.lt.s32.totalorder %s15, 1
        %s141 = scalar_select %p140, %s15, 1
        %p142 = scmp.lt.s32.totalorder %s139, 7
        %s143 = scalar_select %p142, %s139, 7
        %s144 = smul.addr %s141, 8
        %s145 = sadd.s32 %s143, %s144
        %s146 = smul.addr %s145, 8
        %s147 = scalar_lea.vmem %s1, %s146
        %s148 = smul.u32 8, %s16
      $region24: #{maxmin_forward.1} parent=15 // pred_fallthru
        _
    $region16: #{maxmin_forward.1} parent=5 // pred_fallthru
      _
    %p149 = scmp.le.s32.totalorder 1, %s8
    %p150 = scmp.lt.s32.totalorder %s8, 3
    %p151 = pnand %p149, %p150
    %p152 = pneg %p151
    // Predicated region
    $region25: #{maxmin_forward.1} parent=5 // pred_check
      _
    $region26: #{maxmin_forward.1} parent=5 // pred_check_branch
      %154 = sbr.rel (%p151) target = $region28
    $region27: #{maxmin_forward.1} parent=5 // pred_region
      %s155 = ssub.s32 %s8, 1
      %s156 = smul.u32 8, %s18
      %p157 = scmp.lt.s32.totalorder %s17, 1
      %s158 = scalar_select %p157, %s17, 1
      %p159 = scmp.lt.s32.totalorder %s156, 7
      %s160 = scalar_select %p159, %s156, 7
      %s161 = smul.addr %s158, 8
      %s162 = sadd.s32 %s160, %s161
      %s163 = smul.addr %s162, 8
      %s164 = scalar_lea.vmem %s0, %s163
      %p165 = pneg %p48
      %p166 = pneg %p45
      %s167 = smul.u32 8, %s18
      %p168 = scmp.lt.s32.totalorder %s17, 1
      %s169 = scalar_select %p168, %s17, 1
      %p170 = scmp.lt.s32.totalorder %s167, 7
      %s171 = scalar_select %p170, %s167, 7
      %s172 = smul.addr %s169, 8
      %s173 = sadd.s32 %s171, %s172
      %s174 = smul.addr %s173, 8
      %s175 = scalar_lea.vmem %s1, %s174
      %p176 = pneg %p76
      %p177 = pneg %p73
      %p178 = pneg %p104
      %p179 = pneg %p101
      %s180 = smul.u32 8, %s18
      %p181 = scmp.lt.s32.totalorder %s17, 1
      %s182 = scalar_select %p181, %s17, 1
      %p183 = scmp.lt.s32.totalorder %s180, 7
      %s184 = scalar_select %p183, %s180, 7
      %s185 = smul.addr %s182, 16
      %s186 = sadd.s32 %s184, %s185
      %s187 = smul.addr %s186, 8
      %s188 = scalar_lea.vmem %s2, %s187
      %s189 = smul.u32 8, %s18
      %p190 = scmp.lt.s32.totalorder %s17, 1
      %s191 = scalar_select %p190, %s17, 1
      %p192 = scmp.lt.s32.totalorder %s189, 7
      %s193 = scalar_select %p192, %s189, 7
      %s194 = smul.addr %s191, 8
      %s195 = sadd.s32 %s193, %s194
      %s196 = smul.addr %s195, 8
      %s197 = scalar_lea.vmem %s0, %s196
      %s198 = smul.u32 8, %s18
      %s199 = smul.u32 8, %s18
      %p200 = scmp.lt.s32.totalorder %s17, 1
      %s201 = scalar_select %p200, %s17, 1
      %p202 = scmp.lt.s32.totalorder %s199, 7
      %s203 = scalar_select %p202, %s199, 7
      %s204 = smul.addr %s201, 8
      %s205 = sadd.s32 %s203, %s204
      %s206 = smul.addr %s205, 8
      %s207 = scalar_lea.vmem %s1, %s206
      %s208 = smul.u32 8, %s18
      %s209 = smul.u32 8, %s18
      %p210 = scmp.lt.s32.totalorder %s17, 1
      %s211 = scalar_select %p210, %s17, 1
      %p212 = scmp.lt.s32.totalorder %s209, 7
      %s213 = scalar_select %p212, %s209, 7
      %s214 = smul.addr %s211, 16
      %s215 = sadd.s32 %s213, %s214
      %s216 = smul.addr %s215, 8
      %s217 = scalar_lea.vmem %s2, %s216
      %s218 = smul.u32 8, %s18
      %v219 = vld [vmem:[%s197] sm:$0xff]
      %v220 = vld [vmem:[%s197 + $0x8] sm:$0xff]
      %v221 = vld [vmem:[%s197 + $0x10] sm:$0xff]
      %v222 = vld [vmem:[%s197 + $0x18] sm:$0xff]
      %v223 = vld [vmem:[%s197 + $0x20] sm:$0xff]
      %v224 = vld [vmem:[%s197 + $0x28] sm:$0xff]
      %v225 = vld [vmem:[%s197 + $0x30] sm:$0xff]
      %v226 = vld [vmem:[%s197 + $0x38] sm:$0xff]
      %v227 = vld [vmem:[%s207] sm:$0xff]
      %v228 = vld [vmem:[%s207 + $0x8] sm:$0xff]
      %v229 = vld [vmem:[%s207 + $0x10] sm:$0xff]
      %v230 = vld [vmem:[%s207 + $0x18] sm:$0xff]
      %v231 = vld [vmem:[%s207 + $0x20] sm:$0xff]
      %v232 = vld [vmem:[%s207 + $0x28] sm:$0xff]
      %v233 = vld [vmem:[%s207 + $0x30] sm:$0xff]
      %v234 = vld [vmem:[%s207 + $0x38] sm:$0xff]
      %v235 = vmax.f32 %v219, %v227
      %v236 = vmax.f32 %v220, %v228
      %v237 = vmax.f32 %v221, %v229
      %v238 = vmax.f32 %v222, %v230
      %v239 = vmax.f32 %v223, %v231
      %v240 = vmax.f32 %v224, %v232
      %v241 = vmax.f32 %v225, %v233
      %v242 = vmax.f32 %v226, %v234
      %vm243 = vcmask 64512
      %244 = vst.msk [vmem:[%s217] sm:$0xff] %vm243, %v235
      %245 = vst.msk [vmem:[%s217 + $0x8] sm:$0xff] %vm243, %v236
      %246 = vst.msk [vmem:[%s217 + $0x10] sm:$0xff] %vm243, %v237
      %247 = vst.msk [vmem:[%s217 + $0x18] sm:$0xff] %vm243, %v238
      %248 = vst.msk [vmem:[%s217 + $0x20] sm:$0xff] %vm243, %v239
      %249 = vst.msk [vmem:[%s217 + $0x28] sm:$0xff] %vm243, %v240
      %250 = vst.msk [vmem:[%s217 + $0x30] sm:$0xff] %vm243, %v241
      %251 = vst.msk [vmem:[%s217 + $0x38] sm:$0xff] %vm243, %v242
      %v252 = vmin.f32 %v219, %v227
      %v253 = vmin.f32 %v220, %v228
      %v254 = vmin.f32 %v221, %v229
      %v255 = vmin.f32 %v222, %v230
      %v256 = vmin.f32 %v223, %v231
      %v257 = vmin.f32 %v224, %v232
      %v258 = vmin.f32 %v225, %v233
      %v259 = vmin.f32 %v226, %v234
      %s260 = scalar_lea.vmem %s217, 64
      %261 = vst.msk [vmem:[%s260] sm:$0xff] %vm243, %v252
      %262 = vst.msk [vmem:[%s260 + $0x8] sm:$0xff] %vm243, %v253
      %263 = vst.msk [vmem:[%s260 + $0x10] sm:$0xff] %vm243, %v254
      %264 = vst.msk [vmem:[%s260 + $0x18] sm:$0xff] %vm243, %v255
      %265 = vst.msk [vmem:[%s260 + $0x20] sm:$0xff] %vm243, %v256
      %266 = vst.msk [vmem:[%s260 + $0x28] sm:$0xff] %vm243, %v257
      %267 = vst.msk [vmem:[%s260 + $0x30] sm:$0xff] %vm243, %v258
      %268 = vst.msk [vmem:[%s260 + $0x38] sm:$0xff] %vm243, %v259
      %s269 = smul.u32 8, %s18
      %p270 = scmp.lt.s32.totalorder %s17, 1
      %s271 = scalar_select %p270, %s17, 1
      %p272 = scmp.lt.s32.totalorder %s269, 7
      %s273 = scalar_select %p272, %s269, 7
      %s274 = smul.addr %s271, 16
      %s275 = sadd.s32 %s273, %s274
      %s276 = smul.addr %s275, 8
      %s277 = scalar_lea.vmem %s2, %s276
      // Predicated region
      $region29: #{maxmin_forward.1} parent=27 // pred_check
        %p278 = pneg %p101
      $region30: #{maxmin_forward.1} parent=27 // pred_check_branch
        %280 = sbr.rel (%p278) target = $region32
      $region31: #{maxmin_forward.1} parent=27 // pred_region
        %s281 = smul.u32 8, %s18
      $region32: #{maxmin_forward.1} parent=27 // pred_fallthru
        _
    $region28: #{maxmin_forward.1} parent=5 // pred_fallthru
      _
    %p282 = scmp.le.s32.totalorder 2, %s8
    // Predicated region
    $region33: #{maxmin_forward.1} parent=5 // pred_check
      %p283 = pneg %p282
    $region34: #{maxmin_forward.1} parent=5 // pred_check_branch
      %285 = sbr.rel (%p283) target = $region36
    $region35: #{maxmin_forward.1} parent=5 // pred_region
      %s286 = ssub.s32 %s8, 2
      // Predicated region
      $region37: #{maxmin_forward.1} parent=35 // pred_check
        %p287 = pneg %p107
      $region38: #{maxmin_forward.1} parent=35 // pred_check_branch
        %289 = sbr.rel (%p287) target = $region40
      $region39: #{maxmin_forward.1} parent=35 // pred_region
        %s290 = smul.u32 8, %s20
        %p291 = scmp.lt.s32.totalorder %s19, 1
        %s292 = scalar_select %p291, %s19, 1
        %p293 = scmp.lt.s32.totalorder %s290, 7
        %s294 = scalar_select %p293, %s290, 7
        %s295 = smul.addr %s292, 16
        %s296 = sadd.s32 %s294, %s295
        %s297 = smul.addr %s296, 8
        %s298 = scalar_lea.vmem %s2, %s297
      $region40: #{maxmin_forward.1} parent=35 // pred_fallthru
        _
    $region36: #{maxmin_forward.1} parent=5 // pred_fallthru
      _
  $region6: #{maxmin_forward.1} parent=0 // loop_footer
    %s12 = sadd.s32 1, %s8
  $region7: #{maxmin_forward.1} parent=0 // loop_footer_branch
    %7 = sbr.rel target = $region3
  $region8: #{maxmin_forward.1} parent=0 // loop_exit
    _

</llo_original>
